<compile_context>
chip_gen: v5e
topology: v5e:2x2
jax: 0.10.0
libtpu: 0.0.40
codegen_flags: <defaults>
</compile_context>

<pallas_src>
import functools
import math

import jax
import jax.numpy as jnp
from jax.experimental import pallas as pl
from jax.experimental.pallas import tpu as pltpu


def _residual_self_attn_kernel(x_ref, wq_ref, wk_ref, wv_ref, o_ref, *, scale,
                               flatten_proj):
    """Fused self-attention + residual for one batch tile.

    x_ref : (bt, E, Din)   wq_ref/wk_ref : (Din, Dk)   wv_ref : (Din, Dout)
    o_ref : (bt, E, Din)   (Dout == Din for the residual add)
    """
    bt, e, d_in = x_ref.shape
    d_k = wq_ref.shape[-1]
    d_out = wv_ref.shape[-1]

    x = x_ref[...].astype(jnp.float32)
    wq = wq_ref[...].astype(jnp.float32)
    wk = wk_ref[...].astype(jnp.float32)
    wv = wv_ref[...].astype(jnp.float32)

    # --- Projections (MXU). ---
    if flatten_proj:
        # Collapse (bt, e) -> rows: one big matmul per weight fills sublanes
        # far better than bt tiny batched matmuls. Last dim unchanged and
        # e % 8 == 0, so the reshape does not cross (8, 128) tile boundaries.
        x2 = x.reshape(bt * e, d_in)
        q = jnp.dot(x2, wq, preferred_element_type=jnp.float32).reshape(bt, e, d_k)
        k = jnp.dot(x2, wk, preferred_element_type=jnp.float32).reshape(bt, e, d_k)
        v = jnp.dot(x2, wv, preferred_element_type=jnp.float32).reshape(bt, e, d_out)
    else:
        q = jnp.einsum("bed,dk->bek", x, wq, preferred_element_type=jnp.float32)
        k = jnp.einsum("bed,dk->bek", x, wk, preferred_element_type=jnp.float32)
        v = jnp.einsum("bed,dk->bek", x, wv, preferred_element_type=jnp.float32)

    # --- Scaled scores + numerically stable softmax over the key axis. ---
    s = jnp.einsum("bxk,byk->bxy", q, k, preferred_element_type=jnp.float32)
    s = s * scale
    m = jnp.max(s, axis=-1, keepdims=True)
    p = jnp.exp(s - m)
    denom = jnp.sum(p, axis=-1, keepdims=True)

    # --- Attention output; normalize after the P@V matmul (denominator
    # factors out), then the outer residual; single full-tile store. ---
    attn = jnp.einsum("bxy,byk->bxk", p, v, preferred_element_type=jnp.float32)
    attn = attn * pl.reciprocal(denom, approx=False)
    o_ref[...] = (x + attn).astype(o_ref.dtype)


def _pick_block_b(b, e, d_in, d_k, d_out, budget_bytes=8 * 1024 * 1024):
    """Largest divisor of b whose per-step f32 working set fits the budget."""
    per_b = 4 * (
        2 * 2 * e * d_in      # x tile + out tile, double-buffered
        + 2 * e * d_k         # q, k
        + e * d_out           # v
        + 2 * e * e           # scores + probs
        + e * d_out           # attn temp
    )
    best = 1
    for cand in range(1, b + 1):
        if b % cand == 0 and cand * per_b <= budget_bytes:
            best = cand
    return best


def residual_self_attn(x, wq, wk, wv, *, block_b=None):
    """Pallas equivalent of residual(self_attn(in_dim, out_dim, key_dim)).forward."""
    b, e, d_in = x.shape
    d_in_q, d_k = wq.shape
    d_in_v, d_out = wv.shape
    assert d_in_q == d_in and d_in_v == d_in
    assert d_out == d_in, "residual add requires out_dim == in_dim"

    if block_b is None:
        block_b = _pick_block_b(b, e, d_in, d_k, d_out)
    assert b % block_b == 0

    kernel = functools.partial(
        _residual_self_attn_kernel,
        scale=1.0 / math.sqrt(float(d_k)),
        # Only flatten when seq is sublane-aligned so the in-kernel reshape is
        # a free relabeling rather than a relayout copy.
        flatten_proj=(e % 8 == 0),
    )

    return pl.pallas_call(
        kernel,
        out_shape=jax.ShapeDtypeStruct((b, e, d_in), x.dtype),
        grid_spec=pltpu.PrefetchScalarGridSpec(
            num_scalar_prefetch=0,
            grid=(b // block_b,),
            in_specs=[
                pl.BlockSpec((block_b, e, d_in), lambda i: (i, 0, 0)),
                # Constant index_map -> weights DMA'd once, stay VMEM-resident.
                pl.BlockSpec((d_in, d_k), lambda i: (0, 0)),
                pl.BlockSpec((d_in, d_k), lambda i: (0, 0)),
                pl.BlockSpec((d_in, d_out), lambda i: (0, 0)),
            ],
            out_specs=pl.BlockSpec((block_b, e, d_in), lambda i: (i, 0, 0)),
        ),
        compiler_params=pltpu.CompilerParams(
            dimension_semantics=("parallel",),
        ),
    )(x, wq, wk, wv)


def residual_self_attn_ref(x, wq, wk, wv):
    """Pure-JAX reference mirroring the PyTorch module exactly."""
    q = jnp.einsum("bei,ij->bej", x, wq)
    k = jnp.einsum("bei,ij->bej", x, wk)
    v = jnp.einsum("bei,ij->bej", x, wv)
    s = jnp.einsum("bxj,byj->bxy", q, k) / math.sqrt(float(k.shape[-1]))
    w = jax.nn.softmax(s, axis=2)
    attn = jnp.einsum("bey,byj->bej", w, v)
    return x + attn


if __name__ == "__main__":
    # Module hyperparameters: self_attn(in_dim, out_dim, key_dim), wrapped in
    # residual -> out_dim must equal in_dim.
    batch, seq, in_dim, key_dim = 2, 8, 32, 16
    out_dim = in_dim

    key = jax.random.PRNGKey(0)
    kx, kq, kk, kv = jax.random.split(key, 4)

    x = jax.random.normal(kx, (batch, seq, in_dim), dtype=jnp.float32)

    # Emulate self_attn.reset_parameters(): uniform(-1/sqrt(last_dim), +...).
    q_stdv = 1.0 / math.sqrt(key_dim)
    v_stdv = 1.0 / math.sqrt(out_dim)
    wq = jax.random.uniform(kq, (in_dim, key_dim), jnp.float32, -q_stdv, q_stdv)
    wk = jax.random.uniform(kk, (in_dim, key_dim), jnp.float32, -q_stdv, q_stdv)
    wv = jax.random.uniform(kv, (in_dim, out_dim), jnp.float32, -v_stdv, v_stdv)

    out = residual_self_attn(x, wq, wk, wv)
    out = jax.block_until_ready(out)

    ref = residual_self_attn_ref(x, wq, wk, wv)

    assert out.shape == ref.shape, (out.shape, ref.shape)
    assert jnp.allclose(out, ref, atol=1e-5, rtol=1e-5), (
        "Pallas residual(self_attn) mismatch vs reference"
    )

    print("KERNEL_OK")
</pallas_src>

<mosaic_0001>
module attributes {stable_mosaic.version = 11 : i64} {
  func.func @_residual_self_attn_kernel(%arg0: i32, %arg1: memref<2x8x32xf32, #tpu.memory_space<vmem>>, %arg2: memref<32x16xf32, #tpu.memory_space<vmem>>, %arg3: memref<32x16xf32, #tpu.memory_space<vmem>>, %arg4: memref<32x32xf32, #tpu.memory_space<vmem>>, %arg5: memref<2x8x32xf32, #tpu.memory_space<vmem>>) attributes {dimension_semantics = [#tpu.dimension_semantics<parallel>], iteration_bounds = array<i64: 1>, scalar_prefetch = 0 : i64, scratch_operands = 0 : i64, tpu.core_type = #tpu.core_type<tc>, window_params = [{transform_indices = @transform_0, window_bounds = array<i64: 2, 8, 32>}, {pipeline_mode = #tpu.pipeline_mode<synchronous>, transform_indices = @transform_1, window_bounds = array<i64: 32, 16>}, {pipeline_mode = #tpu.pipeline_mode<synchronous>, transform_indices = @transform_2, window_bounds = array<i64: 32, 16>}, {pipeline_mode = #tpu.pipeline_mode<synchronous>, transform_indices = @transform_3, window_bounds = array<i64: 32, 32>}, {transform_indices = @transform_4, window_bounds = array<i64: 2, 8, 32>}]} {
    %c0 = arith.constant 0 : index
    %c0_0 = arith.constant 0 : index
    %c0_1 = arith.constant 0 : index
    %0 = vector.load %arg1[%c0, %c0_0, %c0_1] : memref<2x8x32xf32, #tpu.memory_space<vmem>>, vector<2x8x32xf32>
    %c0_2 = arith.constant 0 : index
    %c0_3 = arith.constant 0 : index
    %1 = vector.load %arg2[%c0_2, %c0_3] : memref<32x16xf32, #tpu.memory_space<vmem>>, vector<32x16xf32>
    %c0_4 = arith.constant 0 : index
    %c0_5 = arith.constant 0 : index
    %2 = vector.load %arg3[%c0_4, %c0_5] : memref<32x16xf32, #tpu.memory_space<vmem>>, vector<32x16xf32>
    %c0_6 = arith.constant 0 : index
    %c0_7 = arith.constant 0 : index
    %3 = vector.load %arg4[%c0_6, %c0_7] : memref<32x32xf32, #tpu.memory_space<vmem>>, vector<32x32xf32>
    %4 = vector.shape_cast %0 : vector<2x8x32xf32> to vector<16x32xf32>
    %cst = arith.constant dense<0.000000e+00> : vector<16x16xf32>
    %5 = tpu.matmul %4, %1, %cst {dimension_numbers = #tpu.dot_dimension_numbers<[1], [0], [0], [1], [0, 0, 1, 1], [], []>} : vector<16x32xf32>, vector<32x16xf32>, vector<16x16xf32> -> vector<16x16xf32>
    %6 = vector.shape_cast %5 : vector<16x16xf32> to vector<2x8x16xf32>
    %cst_8 = arith.constant dense<0.000000e+00> : vector<16x16xf32>
    %7 = tpu.matmul %4, %2, %cst_8 {dimension_numbers = #tpu.dot_dimension_numbers<[1], [0], [0], [1], [0, 0, 1, 1], [], []>} : vector<16x32xf32>, vector<32x16xf32>, vector<16x16xf32> -> vector<16x16xf32>
    %8 = vector.shape_cast %7 : vector<16x16xf32> to vector<2x8x16xf32>
    %cst_9 = arith.constant dense<0.000000e+00> : vector<16x32xf32>
    %9 = tpu.matmul %4, %3, %cst_9 {dimension_numbers = #tpu.dot_dimension_numbers<[1], [0], [0], [1], [0, 0, 1, 1], [], []>} : vector<16x32xf32>, vector<32x32xf32>, vector<16x32xf32> -> vector<16x32xf32>
    %10 = vector.shape_cast %9 : vector<16x32xf32> to vector<2x8x32xf32>
    "tpu.trace_start"() <{level = 10 : i32, message = "bxk,byk->bxy"}> : () -> ()
    %cst_10 = arith.constant dense<0.000000e+00> : vector<2x8x8xf32>
    %11 = tpu.matmul %6, %8, %cst_10 {dimension_numbers = #tpu.dot_dimension_numbers<[2], [2], [1], [1], [0, 0, 0, 1, 1, 1], [0], [0]>} : vector<2x8x16xf32>, vector<2x8x16xf32>, vector<2x8x8xf32> -> vector<2x8x8xf32>
    "tpu.trace_stop"() : () -> ()
    %cst_11 = arith.constant 2.500000e-01 : f32
    %12 = vector.broadcast %cst_11 : f32 to vector<2x8x8xf32>
    %13 = arith.mulf %11, %12 : vector<2x8x8xf32>
    %cst_12 = arith.constant dense<0xFF800000> : vector<2x8xf32>
    %14 = vector.multi_reduction <maximumf>, %13, %cst_12 [2] : vector<2x8x8xf32> to vector<2x8xf32>
    %15 = vector.shape_cast %14 : vector<2x8xf32> to vector<2x8x1xf32>
    %16 = vector.broadcast %15 : vector<2x8x1xf32> to vector<2x8x8xf32>
    %17 = arith.subf %13, %16 : vector<2x8x8xf32>
    %18 = math.exp %17 : vector<2x8x8xf32>
    %cst_13 = arith.constant dense<0.000000e+00> : vector<2x8xf32>
    %19 = vector.multi_reduction <add>, %18, %cst_13 [2] : vector<2x8x8xf32> to vector<2x8xf32>
    %20 = vector.shape_cast %19 : vector<2x8xf32> to vector<2x8x1xf32>
    "tpu.trace_start"() <{level = 10 : i32, message = "bxy,byk->bxk"}> : () -> ()
    %cst_14 = arith.constant dense<0.000000e+00> : vector<2x8x32xf32>
    %21 = tpu.matmul %18, %10, %cst_14 {dimension_numbers = #tpu.dot_dimension_numbers<[2], [1], [1], [2], [0, 0, 0, 1, 1, 2], [0], [0]>} : vector<2x8x8xf32>, vector<2x8x32xf32>, vector<2x8x32xf32> -> vector<2x8x32xf32>
    "tpu.trace_stop"() : () -> ()
    %22 = tpu.reciprocal %20 : vector<2x8x1xf32> -> vector<2x8x1xf32>
    %23 = vector.broadcast %22 : vector<2x8x1xf32> to vector<2x8x32xf32>
    %24 = arith.mulf %21, %23 : vector<2x8x32xf32>
    %25 = arith.addf %0, %24 : vector<2x8x32xf32>
    %c0_15 = arith.constant 0 : index
    %c0_16 = arith.constant 0 : index
    %c0_17 = arith.constant 0 : index
    %26 = vector.load %arg5[%c0_15, %c0_16, %c0_17] : memref<2x8x32xf32, #tpu.memory_space<vmem>>, vector<2x8x32xf32>
    tpu.vector_store %arg5[%c0_15, %c0_16, %c0_17], %25 {strides = array<i32>} : memref<2x8x32xf32, #tpu.memory_space<vmem>>, vector<2x8x32xf32>,
    return
  }
  func.func @transform_0(%arg0: i32) -> (i32, i32, i32) {
    %c0_i32 = arith.constant 0 : i32
    %c0_i32_0 = arith.constant 0 : i32
    %c0_i32_1 = arith.constant 0 : i32
    return %arg0, %c0_i32, %c0_i32_0 : i32, i32, i32
  }
  func.func @transform_1(%arg0: i32) -> (i32, i32) {
    %c0_i32 = arith.constant 0 : i32
    %c0_i32_0 = arith.constant 0 : i32
    %c0_i32_1 = arith.constant 0 : i32
    return %c0_i32, %c0_i32_0 : i32, i32
  }
  func.func @transform_2(%arg0: i32) -> (i32, i32) {
    %c0_i32 = arith.constant 0 : i32
    %c0_i32_0 = arith.constant 0 : i32
    %c0_i32_1 = arith.constant 0 : i32
    return %c0_i32, %c0_i32_0 : i32, i32
  }
  func.func @transform_3(%arg0: i32) -> (i32, i32) {
    %c0_i32 = arith.constant 0 : i32
    %c0_i32_0 = arith.constant 0 : i32
    %c0_i32_1 = arith.constant 0 : i32
    return %c0_i32, %c0_i32_0 : i32, i32
  }
  func.func @transform_4(%arg0: i32) -> (i32, i32, i32) {
    %c0_i32 = arith.constant 0 : i32
    %c0_i32_0 = arith.constant 0 : i32
    %c0_i32_1 = arith.constant 0 : i32
    return %arg0, %c0_i32, %c0_i32_0 : i32, i32, i32
  }
}

</mosaic_0001>

<llo_original>
// kernel: tpu_custom_call.1
$region0: #{tpu_custom_call.1}
  #allocation0 [shape = 'u32[]', space=smem, size = 0x4, offset = 0x4, fixed_abs, tag = 'smem constant byte address 0x4 - core index']
  #allocation1 [shape = 'u32[72,128]{1,0:T(1,128)}', space=vmem, size = 0x9000, scoped, tag = 'internal scratch']
  %s0 = inlined_call_operand.vmem [shape: f32[2,8,32], index: 0, kind: input, shape index: {}]
  %s1 = inlined_call_operand.vmem [shape: f32[32,16], index: 1, kind: input, shape index: {}]
  %s2 = inlined_call_operand.vmem [shape: f32[32,16], index: 2, kind: input, shape index: {}]
  %s3 = inlined_call_operand.vmem [shape: f32[32,32], index: 3, kind: input, shape index: {}]
  %s4 = inlined_call_operand.hbm [shape: f32[2,8,32], index: 4, kind: output, shape index: {}]
  %s5 = sld [smem:[#allocation0]]
  $region26: #{tpu_custom_call.1} parent=0
    _
  %s7 = ssub.s32 1, %s5
  %s8 = scalar_select 0, %s7, %s5
  $region1: #{tpu_custom_call.1} parent=0
    #allocation2 [shape = 'u8[8192]{0}', space=vmem, size = 0x2000, scoped, tag = 'output window, operand 0, single buffered']
    #allocation3 [shape = 's32[1]{0}', space=sflag, size = 0x4, scoped, tag = 'scoped memory for tpu_custom_call.1']
    %9 = vsyncpa [#allocation3], 0
    // Predicated region
    $region2: #{tpu_custom_call.1} parent=1 // pred_check
      _
    $region3: #{tpu_custom_call.1} parent=1 // pred_check_branch
      %11 = sbr.rel (0) target = $region5
    $region4: #{tpu_custom_call.1} parent=1 // pred_region
      _
    $region5: #{tpu_custom_call.1} parent=1 // pred_fallthru
      _
    // Predicated region
    $region6: #{tpu_custom_call.1} parent=1 // pred_check
      _
    $region7: #{tpu_custom_call.1} parent=1 // pred_check_branch
      %13 = sbr.rel (0) target = $region9
    $region8: #{tpu_custom_call.1} parent=1 // pred_region
      _
    $region9: #{tpu_custom_call.1} parent=1 // pred_fallthru
      _
    // Predicated region
    $region10: #{tpu_custom_call.1} parent=1 // pred_check
      _
    $region11: #{tpu_custom_call.1} parent=1 // pred_check_branch
      %15 = sbr.rel (0) target = $region13
    $region12: #{tpu_custom_call.1} parent=1 // pred_region
      _
    $region13: #{tpu_custom_call.1} parent=1 // pred_fallthru
      _
    // Predicated region
    $region14: #{tpu_custom_call.1} parent=1 // pred_check
      _
    $region15: #{tpu_custom_call.1} parent=1 // pred_check_branch
      %17 = sbr.rel (0) target = $region17
    $region16: #{tpu_custom_call.1} parent=1 // pred_region
      _
    $region17: #{tpu_custom_call.1} parent=1 // pred_fallthru
      _
    %v18 = vld [vmem:[%s0] sm:$0xff]
    %v19 = vld [vmem:[%s0 + $0x8] sm:$0xff]
    %v20 = vld [vmem:[%s1] sm:$0xff]
    %v21 = vld [vmem:[%s1 + $0x8] sm:$0xff]
    %v22 = vld [vmem:[%s1 + $0x10] sm:$0xff]
    %v23 = vld [vmem:[%s1 + $0x18] sm:$0xff]
    %v24 = vld [vmem:[%s2] sm:$0xff]
    %v25 = vld [vmem:[%s2 + $0x8] sm:$0xff]
    %v26 = vld [vmem:[%s2 + $0x10] sm:$0xff]
    %v27 = vld [vmem:[%s2 + $0x18] sm:$0xff]
    %v28 = vld [vmem:[%s3] sm:$0xff]
    %v29 = vld [vmem:[%s3 + $0x8] sm:$0xff]
    %v30 = vld [vmem:[%s3 + $0x10] sm:$0xff]
    %v31 = vld [vmem:[%s3 + $0x18] sm:$0xff]
    %vm32 = vcmask 261120
    %v34 = vsel %vm32, %v18, 0
    %v37 = vsel %vm32, %v19, 0
    %39 = vmatpush.msra.mxu0 0.0
    %40 = vmatpush.msra.mxu0 0.0
    %41 = vmatpush.msra.mxu0 0.0
    %42 = vmatpush.msra.mxu0 0.0
    %43 = vmatpush.msra.mxu0 0.0
    %44 = vmatpush.msra.mxu0 0.0
    %45 = vmatpush.msra.mxu0 0.0
    %46 = vmatpush.msra.mxu0 0.0
    %47 = vmatpush.msra.mxu0 0.0
    %48 = vmatpush.msra.mxu0 0.0
    %49 = vmatpush.msra.mxu0 0.0
    %50 = vmatpush.msra.mxu0 0.0
    %51 = vmatpush.msra.mxu0 %v23
    %52 = vmatpush.msra.mxu0 %v22
    %53 = vmatpush.msra.mxu0 %v21
    %54 = vmatpush.msra.mxu0 %v20
    %55 = vmatmul.f32.gmra.mxu0 %v34
    %v56 = vpop.f32.mrf.mxu0
    %v57 = vadd.f32 0.0, %v56
    %58 = vmatmul.f32.gmra.mxu0 %v37
    %v59 = vpop.f32.mrf.mxu0
    %v60 = vadd.f32 0.0, %v59
    %61 = vdwg.mxu0
    %62 = vmatpush.msra.mxu0 0.0
    %63 = vmatpush.msra.mxu0 0.0
    %64 = vmatpush.msra.mxu0 0.0
    %65 = vmatpush.msra.mxu0 0.0
    %66 = vmatpush.msra.mxu0 0.0
    %67 = vmatpush.msra.mxu0 0.0
    %68 = vmatpush.msra.mxu0 0.0
    %69 = vmatpush.msra.mxu0 0.0
    %70 = vmatpush.msra.mxu0 0.0
    %71 = vmatpush.msra.mxu0 0.0
    %72 = vmatpush.msra.mxu0 0.0
    %73 = vmatpush.msra.mxu0 0.0
    %74 = vmatpush.msra.mxu0 %v27
    %75 = vmatpush.msra.mxu0 %v26
    %76 = vmatpush.msra.mxu0 %v25
    %77 = vmatpush.msra.mxu0 %v24
    %78 = vmatmul.f32.gmra.mxu0 %v34
    %v79 = vpop.f32.mrf.mxu0
    %v80 = vadd.f32 0.0, %v79
    %81 = vmatmul.f32.gmra.mxu0 %v37
    %v82 = vpop.f32.mrf.mxu0
    %v83 = vadd.f32 0.0, %v82
    %84 = vdwg.mxu0
    %85 = vmatpush.msra.mxu0 0.0
    %86 = vmatpush.msra.mxu0 0.0
    %87 = vmatpush.msra.mxu0 0.0
    %88 = vmatpush.msra.mxu0 0.0
    %89 = vmatpush.msra.mxu0 0.0
    %90 = vmatpush.msra.mxu0 0.0
    %91 = vmatpush.msra.mxu0 0.0
    %92 = vmatpush.msra.mxu0 0.0
    %93 = vmatpush.msra.mxu0 0.0
    %94 = vmatpush.msra.mxu0 0.0
    %95 = vmatpush.msra.mxu0 0.0
    %96 = vmatpush.msra.mxu0 0.0
    %97 = vmatpush.msra.mxu0 %v31
    %98 = vmatpush.msra.mxu0 %v30
    %99 = vmatpush.msra.mxu0 %v29
    %100 = vmatpush.msra.mxu0 %v28
    %101 = vmatmul.f32.gmra.mxu0 %v34
    %v102 = vpop.f32.mrf.mxu0
    %v103 = vadd.f32 0.0, %v102
    %104 = vmatmul.f32.gmra.mxu0 %v37
    %v105 = vpop.f32.mrf.mxu0
    %v106 = vadd.f32 0.0, %v105
    %107 = vdwg.mxu0
    %vm108 = vcmask 130048
    %v110 = vsel %vm108, %v57, 0
    %v113 = vsel %vm108, %v80, 0
    %115 = vmatpush.xpose.msra.mxu0 0.0
    %116 = vmatpush.xpose.msra.mxu0 0.0
    %117 = vmatpush.xpose.msra.mxu0 0.0
    %118 = vmatpush.xpose.msra.mxu0 0.0
    %119 = vmatpush.xpose.msra.mxu0 0.0
    %120 = vmatpush.xpose.msra.mxu0 0.0
    %121 = vmatpush.xpose.msra.mxu0 0.0
    %122 = vmatpush.xpose.msra.mxu0 0.0
    %123 = vmatpush.xpose.msra.mxu0 0.0
    %124 = vmatpush.xpose.msra.mxu0 0.0
    %125 = vmatpush.xpose.msra.mxu0 0.0
    %126 = vmatpush.xpose.msra.mxu0 0.0
    %127 = vmatpush.xpose.msra.mxu0 0.0
    %128 = vmatpush.xpose.msra.mxu0 0.0
    %129 = vmatpush.xpose.msra.mxu0 0.0
    %130 = vmatpush.xpose.msra.mxu0 %v113
    %131 = vmatmul.f32.gmra.mxu0 %v110
    %v132 = vpop.f32.mrf.mxu0
    %v133 = vadd.f32 0.0, %v132
    %134 = vdwg.mxu0
    %v136 = vsel %vm108, %v60, 0
    %v139 = vsel %vm108, %v83, 0
    %141 = vmatpush.xpose.msra.mxu0 0.0
    %142 = vmatpush.xpose.msra.mxu0 0.0
    %143 = vmatpush.xpose.msra.mxu0 0.0
    %144 = vmatpush.xpose.msra.mxu0 0.0
    %145 = vmatpush.xpose.msra.mxu0 0.0
    %146 = vmatpush.xpose.msra.mxu0 0.0
    %147 = vmatpush.xpose.msra.mxu0 0.0
    %148 = vmatpush.xpose.msra.mxu0 0.0
    %149 = vmatpush.xpose.msra.mxu0 0.0
    %150 = vmatpush.xpose.msra.mxu0 0.0
    %151 = vmatpush.xpose.msra.mxu0 0.0
    %152 = vmatpush.xpose.msra.mxu0 0.0
    %153 = vmatpush.xpose.msra.mxu0 0.0
    %154 = vmatpush.xpose.msra.mxu0 0.0
    %155 = vmatpush.xpose.msra.mxu0 0.0
    %156 = vmatpush.xpose.msra.mxu0 %v139
    %157 = vmatmul.f32.gmra.mxu0 %v136
    %v158 = vpop.f32.mrf.mxu0
    %v159 = vadd.f32 0.0, %v158
    %160 = vdwg.mxu0
    %v161 = vmul.f32 %v133, 0.25
    %v162 = vmul.f32 %v159, 0.25
    %vm163 = vcmask 64512
    %v164 = vsel %vm163, %v161, -inf
    %165 = vmax.xlane.f32.xlu0 %v164
    %v166 = vpop.xlane.xlu0 %165
    %v167 = vsel %vm163, %v162, -inf
    %168 = vmax.xlane.f32.xlu0 %v167
    %v169 = vpop.xlane.xlu0 %168
    %v170 = vsub.f32 %v161, %v166
    %v171 = vsub.f32 %v162, %v169
    %v172 = vmul.f32 %v170, 1.442695
    %v173 = vpow.pop %v172
    %v174 = vmul.f32 %v171, 1.442695
    %v175 = vpow.pop %v174
    %v176 = vsel %vm163, %v173, 0.0
    %177 = vadd.xlane.f32.xlu0 %v176
    %v178 = vpop.xlane.xlu0 %177
    %v179 = vsel %vm163, %v175, 0.0
    %180 = vadd.xlane.f32.xlu0 %v179
    %v181 = vpop.xlane.xlu0 %180
    %v183 = vsel %vm163, %v173, 0
    %185 = vmatpush.msra.mxu0 0.0
    %186 = vmatpush.msra.mxu0 0.0
    %187 = vmatpush.msra.mxu0 0.0
    %188 = vmatpush.msra.mxu0 0.0
    %189 = vmatpush.msra.mxu0 0.0
    %190 = vmatpush.msra.mxu0 0.0
    %191 = vmatpush.msra.mxu0 0.0
    %192 = vmatpush.msra.mxu0 0.0
    %193 = vmatpush.msra.mxu0 0.0
    %194 = vmatpush.msra.mxu0 0.0
    %195 = vmatpush.msra.mxu0 0.0
    %196 = vmatpush.msra.mxu0 0.0
    %197 = vmatpush.msra.mxu0 0.0
    %198 = vmatpush.msra.mxu0 0.0
    %199 = vmatpush.msra.mxu0 0.0
    %200 = vmatpush.msra.mxu0 %v103
    %201 = vmatmul.f32.gmra.mxu0 %v183
    %v202 = vpop.f32.mrf.mxu0
    %v203 = vadd.f32 0.0, %v202
    %204 = vdwg.mxu0
    %v206 = vsel %vm163, %v175, 0
    %208 = vmatpush.msra.mxu0 0.0
    %209 = vmatpush.msra.mxu0 0.0
    %210 = vmatpush.msra.mxu0 0.0
    %211 = vmatpush.msra.mxu0 0.0
    %212 = vmatpush.msra.mxu0 0.0
    %213 = vmatpush.msra.mxu0 0.0
    %214 = vmatpush.msra.mxu0 0.0
    %215 = vmatpush.msra.mxu0 0.0
    %216 = vmatpush.msra.mxu0 0.0
    %217 = vmatpush.msra.mxu0 0.0
    %218 = vmatpush.msra.mxu0 0.0
    %219 = vmatpush.msra.mxu0 0.0
    %220 = vmatpush.msra.mxu0 0.0
    %221 = vmatpush.msra.mxu0 0.0
    %222 = vmatpush.msra.mxu0 0.0
    %223 = vmatpush.msra.mxu0 %v106
    %224 = vmatmul.f32.gmra.mxu0 %v206
    %v225 = vpop.f32.mrf.mxu0
    %v226 = vadd.f32 0.0, %v225
    %227 = vdwg.mxu0
    %v228 = vrcp.pop %v178
    %v229 = vmul.f32 %v178, %v228
    %v230 = vsub.f32 1.0, %v229
    %v231 = vmul.f32 %v228, %v230
    %v232 = vadd.f32 %v228, %v231
    %vm233 = vweird.f32 %v178
    %vm234 = vweird.f32 %v228
    %vm235 = vmor %vm233, %vm234
    %v236 = vsel %vm235, %v228, %v232
    %v237 = vand.u32 2147483647, %v178
    %vm238 = vcmp.eq.f32.partialorder %v237, 8.507059e+37
    %v239 = vand.u32 %v178, 2147483648
    %v240 = vor.u32 1.1754944e-38, %v239
    %v241 = vsel %vm238, %v240, %v236
    %v242 = vrcp.pop %v181
    %v243 = vmul.f32 %v181, %v242
    %v244 = vsub.f32 1.0, %v243
    %v245 = vmul.f32 %v242, %v244
    %v246 = vadd.f32 %v242, %v245
    %vm247 = vweird.f32 %v181
    %vm248 = vweird.f32 %v242
    %vm249 = vmor %vm247, %vm248
    %v250 = vsel %vm249, %v242, %v246
    %v251 = vand.u32 2147483647, %v181
    %vm252 = vcmp.eq.f32.partialorder %v251, 8.507059e+37
    %v253 = vand.u32 %v181, 2147483648
    %v254 = vor.u32 1.1754944e-38, %v253
    %v255 = vsel %vm252, %v254, %v250
    %v256 = vmul.f32 %v203, %v241
    %v257 = vmul.f32 %v226, %v255
    %v258 = vadd.f32 %v18, %v256
    %v259 = vadd.f32 %v19, %v257
    %260 = vst.msk [vmem:[#allocation2] sm:$0xff] %vm32, %v258
    %261 = vst.msk [vmem:[#allocation2 + $0x8] sm:$0xff] %vm32, %v259
    // Predicated region
    $region18: #{tpu_custom_call.1} parent=1 // pred_check
      _
    $region19: #{tpu_custom_call.1} parent=1 // pred_check_branch
      %263 = sbr.rel (0) target = $region21
    $region20: #{tpu_custom_call.1} parent=1 // pred_region
      %265 = vsyncadd [#allocation3], 0
      %s266 = sshll.u32 [#allocation2], 4
      %s267 = int_to_ptr.vmem [resolvable:$true] %s266
      %s268 = sshll.u32 %s4, 4
      %s269 = int_to_ptr.hbm [resolvable:$true] %s268
      %274 = dma.vmem_to_hbm [thread:$0]  %s267, 256, %s269, [#allocation3], 128, 128, 8
    $region21: #{tpu_custom_call.1} parent=1 // pred_fallthru
      _
    // Predicated region
    $region22: #{tpu_custom_call.1} parent=1 // pred_check
      _
    $region23: #{tpu_custom_call.1} parent=1 // pred_check_branch
      %276 = sbr.rel (0) target = $region25
    $region24: #{tpu_custom_call.1} parent=1 // pred_region
      %278 = dma.done [#allocation3], 256
    $region25: #{tpu_custom_call.1} parent=1 // pred_fallthru
      _
    %279 = vsyncpa [#allocation3], 1

</llo_original>
